<compile_context>
chip_gen: v5e
topology: v5e:2x2
jax: 0.10.0
libtpu: 0.0.40
codegen_flags: <defaults>
</compile_context>

<pallas_src>
import jax
import jax.numpy as jnp
from jax import lax
from jax.experimental import pallas as pl
from jax.experimental.pallas import tpu as pltpu

# Synthetic "consts" (SMALL shapes consistent with the module).
NUM_ACTIONS = 16
AC_EMBED_DIM = 32
BATCH = 8

_EPS = 1e-12          # F.normalize default eps (clamp_min on the L2 norm)
_EPS2 = _EPS * _EPS   # clamp on the sum of squares (identical semantics)


def _round_up(x: int, m: int) -> int:
    return ((x + m - 1) // m) * m


def _ac_embed_kernel(pred_ref, w_ref, out_ref):
    pred = pred_ref[...]   # [TB,    D] f32 (current batch tile)
    w = w_ref[...]         # [A_pad, D] f32 (full table, VMEM-resident)

    # Inverse L2 norms via rsqrt (EUP slot). keepdims -> [rows, 1] so the
    # broadcast over [rows, D] is a lane-splat (no XLU relayout).
    inv_p = lax.rsqrt(
        jnp.maximum(jnp.sum(pred * pred, axis=-1, keepdims=True), _EPS2))  # [TB, 1]
    inv_w = lax.rsqrt(
        jnp.maximum(jnp.sum(w * w, axis=-1, keepdims=True), _EPS2))        # [A_pad, 1]

    pn = pred * inv_p      # normalized pred rows
    wn = w * inv_w         # normalized weight rows (zero pad rows stay zero)

    # MXU matmul contracting the LAST dim of both operands (no `.T`).
    out_ref[...] = lax.dot_general(
        pn, wn,
        dimension_numbers=(((1,), (1,)), ((), ())),
        preferred_element_type=jnp.float32,
    )  # [TB, A_pad]


def ac_embed_forward(pred_embed: jax.Array, embed_weight: jax.Array) -> jax.Array:
    """pred_embed: [batch, embed_dim]; embed_weight: [num_actions, embed_dim]."""
    batch, embed_dim = pred_embed.shape
    num_actions, embed_dim_w = embed_weight.shape
    assert embed_dim == embed_dim_w

    pred_embed = pred_embed.astype(jnp.float32)
    embed_weight = embed_weight.astype(jnp.float32)

    # Batch tile: use big (sublane-aligned) tiles so one call covers many rows.
    tile_b = 128 if batch >= 128 else _round_up(batch, 8)
    batch_pad = _round_up(batch, tile_b)
    # Lane-dense output: pad the action dim up to a multiple of 128.
    a_pad = _round_up(num_actions, 128)

    if batch_pad != batch:
        pred_embed = jnp.pad(pred_embed, ((0, batch_pad - batch), (0, 0)))
    if a_pad != num_actions:
        embed_weight = jnp.pad(embed_weight, ((0, a_pad - num_actions), (0, 0)))

    grid = (batch_pad // tile_b,)

    itemsize = jnp.dtype(jnp.float32).itemsize
    cost = pl.CostEstimate(
        flops=2 * batch_pad * a_pad * embed_dim                       # matmul
        + 3 * (batch_pad + a_pad) * embed_dim,                        # normalize
        transcendentals=batch_pad + a_pad,                            # rsqrt / row
        bytes_accessed=itemsize
        * (batch_pad * embed_dim + a_pad * embed_dim + batch_pad * a_pad),
    )

    out = pl.pallas_call(
        _ac_embed_kernel,
        out_shape=jax.ShapeDtypeStruct((batch_pad, a_pad), jnp.float32),
        grid_spec=pltpu.PrefetchScalarGridSpec(
            num_scalar_prefetch=0,
            grid=grid,
            in_specs=[
                # Batch tile marches with the grid.
                pl.BlockSpec((tile_b, embed_dim), lambda i: (i, 0)),
                # Weight block index is constant -> table stays VMEM-resident
                # across all grid steps (DMA'd once per call).
                pl.BlockSpec((a_pad, embed_dim), lambda i: (0, 0)),
            ],
            out_specs=pl.BlockSpec((tile_b, a_pad), lambda i: (i, 0)),
        ),
        compiler_params=pltpu.CompilerParams(
            dimension_semantics=("parallel",),   # dual-TC sharding on v7x
        ),
        cost_estimate=cost,
    )(pred_embed, embed_weight)

    if batch_pad != batch or a_pad != num_actions:
        out = out[:batch, :num_actions]
    return out


def _reference(pred_embed, embed_weight):
    pn = pred_embed / jnp.maximum(
        jnp.linalg.norm(pred_embed, axis=-1, keepdims=True), _EPS)
    wn = embed_weight / jnp.maximum(
        jnp.linalg.norm(embed_weight, axis=-1, keepdims=True), _EPS)
    return pn @ wn.T


if __name__ == "__main__":
    key = jax.random.PRNGKey(0)
    k_pred, k_w = jax.random.split(key)

    # Deterministic synthetic parameters (nn.Embedding weight ~ N(0, 1)).
    pred_embed = jax.random.normal(k_pred, (BATCH, AC_EMBED_DIM), dtype=jnp.float32)
    embed_weight = jax.random.normal(k_w, (NUM_ACTIONS, AC_EMBED_DIM), dtype=jnp.float32)

    logits = ac_embed_forward(pred_embed, embed_weight)
    jax.block_until_ready(logits)

    ref = _reference(pred_embed, embed_weight)
    assert logits.shape == (BATCH, NUM_ACTIONS)
    assert jnp.allclose(logits, ref, atol=1e-5, rtol=1e-5)

    print("KERNEL_OK")
</pallas_src>

<mosaic_0001>
module attributes {stable_mosaic.version = 11 : i64} {
  func.func @_ac_embed_kernel(%arg0: i32, %arg1: memref<8x32xf32, #tpu.memory_space<vmem>>, %arg2: memref<128x32xf32, #tpu.memory_space<vmem>>, %arg3: memref<8x128xf32, #tpu.memory_space<vmem>>) attributes {dimension_semantics = [#tpu.dimension_semantics<parallel>], iteration_bounds = array<i64: 1>, scalar_prefetch = 0 : i64, scratch_operands = 0 : i64, tpu.core_type = #tpu.core_type<tc>, window_params = [{transform_indices = @transform_0, window_bounds = array<i64: 8, 32>}, {pipeline_mode = #tpu.pipeline_mode<synchronous>, transform_indices = @transform_1, window_bounds = array<i64: 128, 32>}, {transform_indices = @transform_2, window_bounds = array<i64: 8, 128>}]} {
    %c0 = arith.constant 0 : index
    %c0_0 = arith.constant 0 : index
    %0 = vector.load %arg1[%c0, %c0_0] : memref<8x32xf32, #tpu.memory_space<vmem>>, vector<8x32xf32>
    %c0_1 = arith.constant 0 : index
    %c0_2 = arith.constant 0 : index
    %1 = vector.load %arg2[%c0_1, %c0_2] : memref<128x32xf32, #tpu.memory_space<vmem>>, vector<128x32xf32>
    %2 = arith.mulf %0, %0 : vector<8x32xf32>
    %cst = arith.constant dense<0.000000e+00> : vector<8xf32>
    %3 = vector.multi_reduction <add>, %2, %cst [1] : vector<8x32xf32> to vector<8xf32>
    %4 = vector.shape_cast %3 : vector<8xf32> to vector<8x1xf32>
    %cst_3 = arith.constant 1.000000e-24 : f32
    %5 = vector.broadcast %cst_3 : f32 to vector<8x1xf32>
    %6 = arith.maximumf %4, %5 : vector<8x1xf32>
    %7 = math.rsqrt %6 : vector<8x1xf32>
    %8 = arith.mulf %1, %1 : vector<128x32xf32>
    %cst_4 = arith.constant dense<0.000000e+00> : vector<128xf32>
    %9 = vector.multi_reduction <add>, %8, %cst_4 [1] : vector<128x32xf32> to vector<128xf32>
    %10 = vector.shape_cast %9 : vector<128xf32> to vector<128x1xf32>
    %cst_5 = arith.constant 1.000000e-24 : f32
    %11 = vector.broadcast %cst_5 : f32 to vector<128x1xf32>
    %12 = arith.maximumf %10, %11 : vector<128x1xf32>
    %13 = math.rsqrt %12 : vector<128x1xf32>
    %14 = vector.broadcast %7 : vector<8x1xf32> to vector<8x32xf32>
    %15 = arith.mulf %0, %14 : vector<8x32xf32>
    %16 = vector.broadcast %13 : vector<128x1xf32> to vector<128x32xf32>
    %17 = arith.mulf %1, %16 : vector<128x32xf32>
    %cst_6 = arith.constant dense<0.000000e+00> : vector<8x128xf32>
    %18 = tpu.matmul %15, %17, %cst_6 {dimension_numbers = #tpu.dot_dimension_numbers<[1], [1], [0], [0], [0, 0, 1, 0], [], []>} : vector<8x32xf32>, vector<128x32xf32>, vector<8x128xf32> -> vector<8x128xf32>
    %c0_7 = arith.constant 0 : index
    %c0_8 = arith.constant 0 : index
    %19 = vector.load %arg3[%c0_7, %c0_8] : memref<8x128xf32, #tpu.memory_space<vmem>>, vector<8x128xf32>
    tpu.vector_store %arg3[%c0_7, %c0_8], %18 {strides = array<i32>} : memref<8x128xf32, #tpu.memory_space<vmem>>, vector<8x128xf32>,
    return
  }
  func.func @transform_0(%arg0: i32) -> (i32, i32) {
    %c0_i32 = arith.constant 0 : i32
    %c0_i32_0 = arith.constant 0 : i32
    return %arg0, %c0_i32 : i32, i32
  }
  func.func @transform_1(%arg0: i32) -> (i32, i32) {
    %c0_i32 = arith.constant 0 : i32
    %c0_i32_0 = arith.constant 0 : i32
    %c0_i32_1 = arith.constant 0 : i32
    return %c0_i32, %c0_i32_0 : i32, i32
  }
  func.func @transform_2(%arg0: i32) -> (i32, i32) {
    %c0_i32 = arith.constant 0 : i32
    %c0_i32_0 = arith.constant 0 : i32
    return %arg0, %c0_i32 : i32, i32
  }
}

</mosaic_0001>

<llo_original>
// kernel: tpu_custom_call.1
$region0: #{tpu_custom_call.1}
  #allocation0 [shape = 'u32[]', space=smem, size = 0x4, offset = 0x4, fixed_abs, tag = 'smem constant byte address 0x4 - core index']
  #allocation1 [shape = 'u32[72,128]{1,0:T(1,128)}', space=vmem, size = 0x9000, scoped, tag = 'internal scratch']
  %s0 = inlined_call_operand.vmem [shape: f32[8,32], index: 0, kind: input, shape index: {}]
  %s1 = inlined_call_operand.vmem [shape: f32[128,32], index: 1, kind: input, shape index: {}]
  %s2 = inlined_call_operand.hbm [shape: f32[8,128], index: 2, kind: output, shape index: {}]
  %s3 = sld [smem:[#allocation0]]
  $region18: #{tpu_custom_call.1} parent=0
    _
  %s5 = ssub.s32 1, %s3
  %s6 = scalar_select 0, %s5, %s3
  $region1: #{tpu_custom_call.1} parent=0
    #allocation2 [shape = 'u8[4096]{0}', space=vmem, size = 0x1000, scoped, tag = 'output window, operand 0, single buffered']
    #allocation3 [shape = 's32[1]{0}', space=sflag, size = 0x4, scoped, tag = 'scoped memory for tpu_custom_call.1']
    %7 = vsyncpa [#allocation3], 0
    // Predicated region
    $region2: #{tpu_custom_call.1} parent=1 // pred_check
      _
    $region3: #{tpu_custom_call.1} parent=1 // pred_check_branch
      %9 = sbr.rel (0) target = $region5
    $region4: #{tpu_custom_call.1} parent=1 // pred_region
      _
    $region5: #{tpu_custom_call.1} parent=1 // pred_fallthru
      _
    // Predicated region
    $region6: #{tpu_custom_call.1} parent=1 // pred_check
      _
    $region7: #{tpu_custom_call.1} parent=1 // pred_check_branch
      %11 = sbr.rel (0) target = $region9
    $region8: #{tpu_custom_call.1} parent=1 // pred_region
      _
    $region9: #{tpu_custom_call.1} parent=1 // pred_fallthru
      _
    %v12 = vld [vmem:[%s0] sm:$0xff]
    %v13 = vld [vmem:[%s1] sm:$0xff]
    %v14 = vld [vmem:[%s1 + $0x8] sm:$0xff]
    %v15 = vld [vmem:[%s1 + $0x10] sm:$0xff]
    %v16 = vld [vmem:[%s1 + $0x18] sm:$0xff]
    %v17 = vld [vmem:[%s1 + $0x20] sm:$0xff]
    %v18 = vld [vmem:[%s1 + $0x28] sm:$0xff]
    %v19 = vld [vmem:[%s1 + $0x30] sm:$0xff]
    %v20 = vld [vmem:[%s1 + $0x38] sm:$0xff]
    %v21 = vld [vmem:[%s1 + $0x40] sm:$0xff]
    %v22 = vld [vmem:[%s1 + $0x48] sm:$0xff]
    %v23 = vld [vmem:[%s1 + $0x50] sm:$0xff]
    %v24 = vld [vmem:[%s1 + $0x58] sm:$0xff]
    %v25 = vld [vmem:[%s1 + $0x60] sm:$0xff]
    %v26 = vld [vmem:[%s1 + $0x68] sm:$0xff]
    %v27 = vld [vmem:[%s1 + $0x70] sm:$0xff]
    %v28 = vld [vmem:[%s1 + $0x78] sm:$0xff]
    %v29 = vmul.f32 %v12, %v12
    %vm30 = vcmask 261120
    %v31 = vsel %vm30, %v29, 0.0
    %32 = vadd.xlane.f32.xlu0 %v31
    %v33 = vpop.xlane.xlu0 %32
    %v34 = vmax.f32 %v33, 1e-24
    %v35 = vrsqrt.pop %v34
    %v36 = vmul.f32 %v35, %v34
    %v37 = vmul.f32 %v36, %v35
    %v38 = vmul.f32 0.5, %v37
    %v39 = vsub.f32 1.5, %v38
    %v40 = vmul.f32 %v35, %v39
    %vm41 = vweird.f32 %v34
    %vm42 = vweird.f32 %v35
    %vm43 = vmor %vm41, %vm42
    %v44 = vsel %vm43, %v35, %v40
    %v45 = vmul.f32 %v13, %v13
    %v46 = vmul.f32 %v14, %v14
    %v47 = vmul.f32 %v15, %v15
    %v48 = vmul.f32 %v16, %v16
    %v49 = vmul.f32 %v17, %v17
    %v50 = vmul.f32 %v18, %v18
    %v51 = vmul.f32 %v19, %v19
    %v52 = vmul.f32 %v20, %v20
    %v53 = vmul.f32 %v21, %v21
    %v54 = vmul.f32 %v22, %v22
    %v55 = vmul.f32 %v23, %v23
    %v56 = vmul.f32 %v24, %v24
    %v57 = vmul.f32 %v25, %v25
    %v58 = vmul.f32 %v26, %v26
    %v59 = vmul.f32 %v27, %v27
    %v60 = vmul.f32 %v28, %v28
    %v61 = vsel %vm30, %v45, 0.0
    %62 = vadd.xlane.f32.xlu0 %v61
    %v63 = vpop.xlane.xlu0 %62
    %v64 = vsel %vm30, %v46, 0.0
    %65 = vadd.xlane.f32.xlu0 %v64
    %v66 = vpop.xlane.xlu0 %65
    %v67 = vsel %vm30, %v47, 0.0
    %68 = vadd.xlane.f32.xlu0 %v67
    %v69 = vpop.xlane.xlu0 %68
    %v70 = vsel %vm30, %v48, 0.0
    %71 = vadd.xlane.f32.xlu0 %v70
    %v72 = vpop.xlane.xlu0 %71
    %v73 = vsel %vm30, %v49, 0.0
    %74 = vadd.xlane.f32.xlu0 %v73
    %v75 = vpop.xlane.xlu0 %74
    %v76 = vsel %vm30, %v50, 0.0
    %77 = vadd.xlane.f32.xlu0 %v76
    %v78 = vpop.xlane.xlu0 %77
    %v79 = vsel %vm30, %v51, 0.0
    %80 = vadd.xlane.f32.xlu0 %v79
    %v81 = vpop.xlane.xlu0 %80
    %v82 = vsel %vm30, %v52, 0.0
    %83 = vadd.xlane.f32.xlu0 %v82
    %v84 = vpop.xlane.xlu0 %83
    %v85 = vsel %vm30, %v53, 0.0
    %86 = vadd.xlane.f32.xlu0 %v85
    %v87 = vpop.xlane.xlu0 %86
    %v88 = vsel %vm30, %v54, 0.0
    %89 = vadd.xlane.f32.xlu0 %v88
    %v90 = vpop.xlane.xlu0 %89
    %v91 = vsel %vm30, %v55, 0.0
    %92 = vadd.xlane.f32.xlu0 %v91
    %v93 = vpop.xlane.xlu0 %92
    %v94 = vsel %vm30, %v56, 0.0
    %95 = vadd.xlane.f32.xlu0 %v94
    %v96 = vpop.xlane.xlu0 %95
    %v97 = vsel %vm30, %v57, 0.0
    %98 = vadd.xlane.f32.xlu0 %v97
    %v99 = vpop.xlane.xlu0 %98
    %v100 = vsel %vm30, %v58, 0.0
    %101 = vadd.xlane.f32.xlu0 %v100
    %v102 = vpop.xlane.xlu0 %101
    %v103 = vsel %vm30, %v59, 0.0
    %104 = vadd.xlane.f32.xlu0 %v103
    %v105 = vpop.xlane.xlu0 %104
    %v106 = vsel %vm30, %v60, 0.0
    %107 = vadd.xlane.f32.xlu0 %v106
    %v108 = vpop.xlane.xlu0 %107
    %v109 = vmax.f32 %v63, 1e-24
    %v110 = vmax.f32 %v66, 1e-24
    %v111 = vmax.f32 %v69, 1e-24
    %v112 = vmax.f32 %v72, 1e-24
    %v113 = vmax.f32 %v75, 1e-24
    %v114 = vmax.f32 %v78, 1e-24
    %v115 = vmax.f32 %v81, 1e-24
    %v116 = vmax.f32 %v84, 1e-24
    %v117 = vmax.f32 %v87, 1e-24
    %v118 = vmax.f32 %v90, 1e-24
    %v119 = vmax.f32 %v93, 1e-24
    %v120 = vmax.f32 %v96, 1e-24
    %v121 = vmax.f32 %v99, 1e-24
    %v122 = vmax.f32 %v102, 1e-24
    %v123 = vmax.f32 %v105, 1e-24
    %v124 = vmax.f32 %v108, 1e-24
    %v125 = vrsqrt.pop %v109
    %v126 = vmul.f32 %v125, %v109
    %v127 = vmul.f32 %v126, %v125
    %v128 = vmul.f32 0.5, %v127
    %v129 = vsub.f32 1.5, %v128
    %v130 = vmul.f32 %v125, %v129
    %vm131 = vweird.f32 %v109
    %vm132 = vweird.f32 %v125
    %vm133 = vmor %vm131, %vm132
    %v134 = vsel %vm133, %v125, %v130
    %v135 = vrsqrt.pop %v110
    %v136 = vmul.f32 %v135, %v110
    %v137 = vmul.f32 %v136, %v135
    %v138 = vmul.f32 0.5, %v137
    %v139 = vsub.f32 1.5, %v138
    %v140 = vmul.f32 %v135, %v139
    %vm141 = vweird.f32 %v110
    %vm142 = vweird.f32 %v135
    %vm143 = vmor %vm141, %vm142
    %v144 = vsel %vm143, %v135, %v140
    %v145 = vrsqrt.pop %v111
    %v146 = vmul.f32 %v145, %v111
    %v147 = vmul.f32 %v146, %v145
    %v148 = vmul.f32 0.5, %v147
    %v149 = vsub.f32 1.5, %v148
    %v150 = vmul.f32 %v145, %v149
    %vm151 = vweird.f32 %v111
    %vm152 = vweird.f32 %v145
    %vm153 = vmor %vm151, %vm152
    %v154 = vsel %vm153, %v145, %v150
    %v155 = vrsqrt.pop %v112
    %v156 = vmul.f32 %v155, %v112
    %v157 = vmul.f32 %v156, %v155
    %v158 = vmul.f32 0.5, %v157
    %v159 = vsub.f32 1.5, %v158
    %v160 = vmul.f32 %v155, %v159
    %vm161 = vweird.f32 %v112
    %vm162 = vweird.f32 %v155
    %vm163 = vmor %vm161, %vm162
    %v164 = vsel %vm163, %v155, %v160
    %v165 = vrsqrt.pop %v113
    %v166 = vmul.f32 %v165, %v113
    %v167 = vmul.f32 %v166, %v165
    %v168 = vmul.f32 0.5, %v167
    %v169 = vsub.f32 1.5, %v168
    %v170 = vmul.f32 %v165, %v169
    %vm171 = vweird.f32 %v113
    %vm172 = vweird.f32 %v165
    %vm173 = vmor %vm171, %vm172
    %v174 = vsel %vm173, %v165, %v170
    %v175 = vrsqrt.pop %v114
    %v176 = vmul.f32 %v175, %v114
    %v177 = vmul.f32 %v176, %v175
    %v178 = vmul.f32 0.5, %v177
    %v179 = vsub.f32 1.5, %v178
    %v180 = vmul.f32 %v175, %v179
    %vm181 = vweird.f32 %v114
    %vm182 = vweird.f32 %v175
    %vm183 = vmor %vm181, %vm182
    %v184 = vsel %vm183, %v175, %v180
    %v185 = vrsqrt.pop %v115
    %v186 = vmul.f32 %v185, %v115
    %v187 = vmul.f32 %v186, %v185
    %v188 = vmul.f32 0.5, %v187
    %v189 = vsub.f32 1.5, %v188
    %v190 = vmul.f32 %v185, %v189
    %vm191 = vweird.f32 %v115
    %vm192 = vweird.f32 %v185
    %vm193 = vmor %vm191, %vm192
    %v194 = vsel %vm193, %v185, %v190
    %v195 = vrsqrt.pop %v116
    %v196 = vmul.f32 %v195, %v116
    %v197 = vmul.f32 %v196, %v195
    %v198 = vmul.f32 0.5, %v197
    %v199 = vsub.f32 1.5, %v198
    %v200 = vmul.f32 %v195, %v199
    %vm201 = vweird.f32 %v116
    %vm202 = vweird.f32 %v195
    %vm203 = vmor %vm201, %vm202
    %v204 = vsel %vm203, %v195, %v200
    %v205 = vrsqrt.pop %v117
    %v206 = vmul.f32 %v205, %v117
    %v207 = vmul.f32 %v206, %v205
    %v208 = vmul.f32 0.5, %v207
    %v209 = vsub.f32 1.5, %v208
    %v210 = vmul.f32 %v205, %v209
    %vm211 = vweird.f32 %v117
    %vm212 = vweird.f32 %v205
    %vm213 = vmor %vm211, %vm212
    %v214 = vsel %vm213, %v205, %v210
    %v215 = vrsqrt.pop %v118
    %v216 = vmul.f32 %v215, %v118
    %v217 = vmul.f32 %v216, %v215
    %v218 = vmul.f32 0.5, %v217
    %v219 = vsub.f32 1.5, %v218
    %v220 = vmul.f32 %v215, %v219
    %vm221 = vweird.f32 %v118
    %vm222 = vweird.f32 %v215
    %vm223 = vmor %vm221, %vm222
    %v224 = vsel %vm223, %v215, %v220
    %v225 = vrsqrt.pop %v119
    %v226 = vmul.f32 %v225, %v119
    %v227 = vmul.f32 %v226, %v225
    %v228 = vmul.f32 0.5, %v227
    %v229 = vsub.f32 1.5, %v228
    %v230 = vmul.f32 %v225, %v229
    %vm231 = vweird.f32 %v119
    %vm232 = vweird.f32 %v225
    %vm233 = vmor %vm231, %vm232
    %v234 = vsel %vm233, %v225, %v230
    %v235 = vrsqrt.pop %v120
    %v236 = vmul.f32 %v235, %v120
    %v237 = vmul.f32 %v236, %v235
    %v238 = vmul.f32 0.5, %v237
    %v239 = vsub.f32 1.5, %v238
    %v240 = vmul.f32 %v235, %v239
    %vm241 = vweird.f32 %v120
    %vm242 = vweird.f32 %v235
    %vm243 = vmor %vm241, %vm242
    %v244 = vsel %vm243, %v235, %v240
    %v245 = vrsqrt.pop %v121
    %v246 = vmul.f32 %v245, %v121
    %v247 = vmul.f32 %v246, %v245
    %v248 = vmul.f32 0.5, %v247
    %v249 = vsub.f32 1.5, %v248
    %v250 = vmul.f32 %v245, %v249
    %vm251 = vweird.f32 %v121
    %vm252 = vweird.f32 %v245
    %vm253 = vmor %vm251, %vm252
    %v254 = vsel %vm253, %v245, %v250
    %v255 = vrsqrt.pop %v122
    %v256 = vmul.f32 %v255, %v122
    %v257 = vmul.f32 %v256, %v255
    %v258 = vmul.f32 0.5, %v257
    %v259 = vsub.f32 1.5, %v258
    %v260 = vmul.f32 %v255, %v259
    %vm261 = vweird.f32 %v122
    %vm262 = vweird.f32 %v255
    %vm263 = vmor %vm261, %vm262
    %v264 = vsel %vm263, %v255, %v260
    %v265 = vrsqrt.pop %v123
    %v266 = vmul.f32 %v265, %v123
    %v267 = vmul.f32 %v266, %v265
    %v268 = vmul.f32 0.5, %v267
    %v269 = vsub.f32 1.5, %v268
    %v270 = vmul.f32 %v265, %v269
    %vm271 = vweird.f32 %v123
    %vm272 = vweird.f32 %v265
    %vm273 = vmor %vm271, %vm272
    %v274 = vsel %vm273, %v265, %v270
    %v275 = vrsqrt.pop %v124
    %v276 = vmul.f32 %v275, %v124
    %v277 = vmul.f32 %v276, %v275
    %v278 = vmul.f32 0.5, %v277
    %v279 = vsub.f32 1.5, %v278
    %v280 = vmul.f32 %v275, %v279
    %vm281 = vweird.f32 %v124
    %vm282 = vweird.f32 %v275
    %vm283 = vmor %vm281, %vm282
    %v284 = vsel %vm283, %v275, %v280
    %v285 = vmul.f32 %v12, %v44
    %v286 = vmul.f32 %v13, %v134
    %v287 = vmul.f32 %v14, %v144
    %v288 = vmul.f32 %v15, %v154
    %v289 = vmul.f32 %v16, %v164
    %v290 = vmul.f32 %v17, %v174
    %v291 = vmul.f32 %v18, %v184
    %v292 = vmul.f32 %v19, %v194
    %v293 = vmul.f32 %v20, %v204
    %v294 = vmul.f32 %v21, %v214
    %v295 = vmul.f32 %v22, %v224
    %v296 = vmul.f32 %v23, %v234
    %v297 = vmul.f32 %v24, %v244
    %v298 = vmul.f32 %v25, %v254
    %v299 = vmul.f32 %v26, %v264
    %v300 = vmul.f32 %v27, %v274
    %v301 = vmul.f32 %v28, %v284
    %v303 = vsel %vm30, %v285, 0
    %v306 = vsel %vm30, %v286, 0
    %v309 = vsel %vm30, %v287, 0
    %v312 = vsel %vm30, %v288, 0
    %v315 = vsel %vm30, %v289, 0
    %v318 = vsel %vm30, %v290, 0
    %v321 = vsel %vm30, %v291, 0
    %v324 = vsel %vm30, %v292, 0
    %v327 = vsel %vm30, %v293, 0
    %v330 = vsel %vm30, %v294, 0
    %v333 = vsel %vm30, %v295, 0
    %v336 = vsel %vm30, %v296, 0
    %v339 = vsel %vm30, %v297, 0
    %v342 = vsel %vm30, %v298, 0
    %v345 = vsel %vm30, %v299, 0
    %v348 = vsel %vm30, %v300, 0
    %v351 = vsel %vm30, %v301, 0
    %353 = vmatpush.xpose.msra.mxu0 %v351
    %354 = vmatpush.xpose.msra.mxu0 %v348
    %355 = vmatpush.xpose.msra.mxu0 %v345
    %356 = vmatpush.xpose.msra.mxu0 %v342
    %357 = vmatpush.xpose.msra.mxu0 %v339
    %358 = vmatpush.xpose.msra.mxu0 %v336
    %359 = vmatpush.xpose.msra.mxu0 %v333
    %360 = vmatpush.xpose.msra.mxu0 %v330
    %361 = vmatpush.xpose.msra.mxu0 %v327
    %362 = vmatpush.xpose.msra.mxu0 %v324
    %363 = vmatpush.xpose.msra.mxu0 %v321
    %364 = vmatpush.xpose.msra.mxu0 %v318
    %365 = vmatpush.xpose.msra.mxu0 %v315
    %366 = vmatpush.xpose.msra.mxu0 %v312
    %367 = vmatpush.xpose.msra.mxu0 %v309
    %368 = vmatpush.xpose.msra.mxu0 %v306
    %369 = vmatmul.f32.gmra.mxu0 %v303
    %v370 = vpop.f32.mrf.mxu0
    %v371 = vadd.f32 0.0, %v370
    %372 = vdwg.mxu0
    %373 = vst [vmem:[#allocation2] sm:$0xff] %v371
    // Predicated region
    $region10: #{tpu_custom_call.1} parent=1 // pred_check
      _
    $region11: #{tpu_custom_call.1} parent=1 // pred_check_branch
      %375 = sbr.rel (0) target = $region13
    $region12: #{tpu_custom_call.1} parent=1 // pred_region
      %377 = vsyncadd [#allocation3], 0
      %s379 = sshll.u32 [#allocation2], 4
      %s380 = int_to_ptr.vmem [resolvable:$true] %s379
      %s381 = sshll.u32 %s2, 4
      %s382 = int_to_ptr.hbm [resolvable:$true] %s381
      %384 = dma.vmem_to_hbm [thread:$0]  %s380, 128, %s382, [#allocation3]
    $region13: #{tpu_custom_call.1} parent=1 // pred_fallthru
      _
    // Predicated region
    $region14: #{tpu_custom_call.1} parent=1 // pred_check
      _
    $region15: #{tpu_custom_call.1} parent=1 // pred_check_branch
      %386 = sbr.rel (0) target = $region17
    $region16: #{tpu_custom_call.1} parent=1 // pred_region
      %388 = dma.done [#allocation3], 128
    $region17: #{tpu_custom_call.1} parent=1 // pred_fallthru
      _
    %389 = vsyncpa [#allocation3], 1

</llo_original>
